<compile_context>
chip_gen: v6e
topology: v6e:2x2x1
jax: 0.10.0
libtpu: 0.0.40
codegen_flags: <defaults>
</compile_context>

<pallas_src>
import functools

import jax
import jax.numpy as jnp
from jax import lax
from jax.experimental import pallas as pl
from jax.experimental.pallas import tpu as pltpu

HIDDEN_SIZE = 10
INPUT_SIZE = 1


def _round_up(x, m):
    return ((x + m - 1) // m) * m


def _rnn_seq_kernel(nonlinearity, chunk, hidden,
                    xs_ref,      # SMEM (T_pad,)   per-step scalar inputs (1-D!)
                    prev_ref,    # VMEM (1, H)     initial hidden state (row layout)
                    w_aug_ref,   # VMEM (H, H+1)   [W_rec^T | W_rec^T @ fc_w^T]
                    wb_ref,      # VMEM (2, H+1)   row0=[W_in^T | fc_w@W_in], row1=[bias | fc_w@bias+fc_b]
                    out_ref,     # VMEM (chunk, H+1) resident output block for this chunk
                    state_ref):  # VMEM (1, H)     hidden-state carry across chunks
    c = pl.program_id(0)

    @pl.when(c == 0)
    def _():
        state_ref[...] = prev_ref[...]

    # Hoist weight loads out of the time loop (blocks are VMEM-resident anyway).
    w_aug = w_aug_ref[...]                       # (H, H+1)
    wb_x = wb_ref[0:1, :]                        # (1, H+1): [W_in^T | fc_w @ W_in]
    wb_b = wb_ref[1:2, :]                        # (1, H+1): [bias   | fc_w @ bias + fc_b]
    base = c * chunk                             # chunk is a Python int (static)
    nl = jnp.tanh if nonlinearity == "tanh" else jax.nn.sigmoid

    def step(i, state):                          # state: (1, H) f32 loop carry
        h = nl(state)
        # (1,H) @ (H,H+1) on MXU: lanes 0..H-1 = (W_rec @ h)^T, lane H = fc_w @ (W_rec @ h)
        rec = jnp.dot(h, w_aug, preferred_element_type=jnp.float32)
        x = xs_ref[base + i]                     # scalar read from SMEM
        row = rec + x * wb_x + wb_b              # (1, H+1) = [next_state | fc output]
        out_ref[pl.ds(i, 1), :] = row.astype(out_ref.dtype)   # VMEM store (no HBM DMA)
        return row[:, :hidden]                   # carry next_state to step i+1

    # Whole chunk runs inside ONE grid step; unrolled so the LLO scheduler can
    # overlap the x*wb / store / SMEM-read work with the tanh->MXU->add chain.
    state = lax.fori_loop(0, chunk, step, state_ref[...], unroll=min(8, chunk))
    state_ref[...] = state                       # carry hidden state to next chunk


def prepare_params(params):
    """One-time layout prep: transpose / fold / pack OUTSIDE the per-call hot path."""
    H = params["W_rec"].shape[0]
    w_rec_t = jnp.asarray(params["W_rec"], jnp.float32).T                  # (H, H)
    w_in = jnp.reshape(jnp.asarray(params["W_in"], jnp.float32), (H,))     # input_size=1
    bias = jnp.reshape(jnp.asarray(params["bias"], jnp.float32), (H,))
    fc_w = jnp.reshape(jnp.asarray(params["fc_w"], jnp.float32), (H,))
    fc_b = jnp.reshape(jnp.asarray(params["fc_b"], jnp.float32), ())

    # Fold the fc head into the recurrent matmul (extra MXU column is free at H=10).
    v = w_rec_t @ fc_w[:, None]                                            # (H, 1)
    w_aug = jnp.concatenate([w_rec_t, v], axis=1)                          # (H, H+1)
    c_in = jnp.dot(fc_w, w_in)                                             # fc_w @ W_in
    c_bias = jnp.dot(fc_w, bias) + fc_b                                    # fc_w @ bias + fc_b
    wb_aug = jnp.stack([jnp.concatenate([w_in, c_in[None]]),
                        jnp.concatenate([bias, c_bias[None]])])            # (2, H+1)
    return {"w_aug": w_aug, "wb_aug": wb_aug}


@functools.partial(jax.jit, static_argnames=("nonlinearity", "chunk_size"))
def rnn_sequence_forward(prepped, xs, prev_state=None, nonlinearity="tanh",
                         chunk_size=512):
    """Run T recurrent steps; the whole time loop lives inside the kernel.

    Args:
      prepped: output of prepare_params.
      xs: (T,) or (T, 1) scalar inputs (input_size=1).
      prev_state: (H, 1) / (H,) initial state, or None for zeros.
      chunk_size: time steps per grid iteration (amortizes grid overhead,
        bounds the resident VMEM output block; 512 * 11 f32 < 25 KiB).
    Returns:
      (outputs (T, 1), states (T, H)) — per-step fc outputs and next_states.
    """
    if nonlinearity not in ("tanh", "sigmoid"):
        raise ValueError("Invalid nonlinearity selected for RNN.")
    w_aug = prepped["w_aug"]
    wb_aug = prepped["wb_aug"]
    H, H1 = w_aug.shape

    xs = jnp.reshape(jnp.asarray(xs, jnp.float32), (-1,))   # 1-D -> SMEM-friendly
    T = xs.shape[0]

    if T <= chunk_size:
        # Single chunk: block equals full array dims, one HBM writeback total.
        C, T_pad = T, T
    else:
        # Chunked time axis: C multiple of 8 so the (C, H1) block is legal.
        C = _round_up(chunk_size, 8)
        T_pad = _round_up(T, C)
    num_chunks = T_pad // C
    if T_pad != T:
        xs = jnp.concatenate([xs, jnp.zeros((T_pad - T,), jnp.float32)])

    if prev_state is None:
        prev_row = jnp.zeros((1, H), jnp.float32)
    else:
        prev_row = jnp.reshape(jnp.asarray(prev_state, jnp.float32), (1, H))

    kernel = functools.partial(_rnn_seq_kernel, nonlinearity, C, H)
    out_rows = pl.pallas_call(
        kernel,
        out_shape=jax.ShapeDtypeStruct((T_pad, H1), jnp.float32),
        grid_spec=pltpu.PrefetchScalarGridSpec(
            num_scalar_prefetch=0,
            grid=(num_chunks,),
            in_specs=[
                # per-step scalar inputs: whole 1-D array in SMEM
                pl.BlockSpec(memory_space=pltpu.MemorySpace.SMEM),
                # initial state + weights: constant block index -> VMEM-resident
                pl.BlockSpec((1, H), lambda c: (0, 0)),
                pl.BlockSpec((H, H1), lambda c: (0, 0)),
                pl.BlockSpec((2, H1), lambda c: (0, 0)),
            ],
            # per-chunk output block stays in VMEM; one HBM writeback per chunk
            out_specs=pl.BlockSpec((C, H1), lambda c: (c, 0)),
            scratch_shapes=[pltpu.VMEM((1, H), jnp.float32)],
        ),
        compiler_params=pltpu.CompilerParams(
            dimension_semantics=("arbitrary",)),  # recurrence is strictly serial in time
    )(xs, prev_row, w_aug, wb_aug)

    out_rows = out_rows[:T]
    return out_rows[:, H:], out_rows[:, :H]       # outputs (T,1), states (T,H)


def rnn_cell_forward(prepped, x, prev_state=None, nonlinearity="tanh"):
    """Mirror of RNNCell.forward: returns (output (1,), next_state (H,))."""
    outputs, states = rnn_sequence_forward(
        prepped, jnp.reshape(jnp.asarray(x, jnp.float32), (1,)), prev_state,
        nonlinearity=nonlinearity)
    return outputs[0], states[0]


def init_params(key, hidden_size=HIDDEN_SIZE, input_size=INPUT_SIZE):
    k1, k2, k3, k4, k5 = jax.random.split(key, 5)
    return {
        "W_rec": jax.random.normal(k1, (hidden_size, hidden_size), jnp.float32),
        "W_in": jax.random.normal(k2, (hidden_size, input_size), jnp.float32),
        "bias": jax.random.normal(k3, (hidden_size,), jnp.float32),
        # nn.Linear(hidden_size, 1): weight (1, H), bias (1,)
        "fc_w": jax.random.normal(k4, (1, hidden_size), jnp.float32) * 0.1,
        "fc_b": jax.random.normal(k5, (1,), jnp.float32) * 0.1,
    }


# ----------------------------- pure-JAX references -----------------------------

def _reference_step(params, x, prev_state, nonlinearity="tanh"):
    H = params["W_rec"].shape[0]
    nl = jnp.tanh if nonlinearity == "tanh" else jax.nn.sigmoid
    xi = jnp.reshape(x, (1,)).astype(jnp.float32)
    next_state = (jnp.matmul(params["W_rec"], nl(prev_state)).reshape(H)
                  + jnp.matmul(params["W_in"], xi) + params["bias"])
    output = jnp.matmul(params["fc_w"].reshape(1, H), next_state) + params["fc_b"]
    return output, next_state


def _reference_sequence(params, xs, prev_state, nonlinearity="tanh"):
    H = params["W_rec"].shape[0]
    state0 = (jnp.zeros((H, 1), jnp.float32) if prev_state is None
              else jnp.reshape(prev_state, (H, 1)).astype(jnp.float32))

    def step(state, x):
        out, nxt = _reference_step(params, x, state, nonlinearity)
        return nxt.reshape(H, 1), (out, nxt)

    _, (outs, states) = lax.scan(step, state0, jnp.asarray(xs, jnp.float32))
    return outs, states


if __name__ == "__main__":
    key = jax.random.PRNGKey(0)
    kp, kx, kh, ks = jax.random.split(key, 4)

    params = init_params(kp)
    prepped = prepare_params(params)   # layout / fold / pack done once

    # ---- single step (exact RNNCell.forward semantics) ----
    x = jax.random.normal(kx, (1,), jnp.float32)
    prev_state = jax.random.normal(kh, (HIDDEN_SIZE, 1), jnp.float32)

    out, next_state = rnn_cell_forward(prepped, x, prev_state, nonlinearity="tanh")
    out, next_state = jax.block_until_ready((out, next_state))
    ref_out, ref_next = _reference_step(params, x, prev_state, "tanh")
    assert out.shape == (1,) and next_state.shape == (HIDDEN_SIZE,)
    assert jnp.allclose(out, ref_out.reshape(1,), atol=1e-4, rtol=1e-4)
    assert jnp.allclose(next_state, ref_next, atol=1e-4, rtol=1e-4)

    # prev_state=None path (torch.zeros default)
    out0, next0 = rnn_cell_forward(prepped, x, None, nonlinearity="tanh")
    out0, next0 = jax.block_until_ready((out0, next0))
    ref_out0, ref_next0 = _reference_step(
        params, x, jnp.zeros((HIDDEN_SIZE, 1), jnp.float32), "tanh")
    assert jnp.allclose(out0, ref_out0.reshape(1,), atol=1e-4, rtol=1e-4)
    assert jnp.allclose(next0, ref_next0, atol=1e-4, rtol=1e-4)

    # sigmoid nonlinearity path
    out_s, next_s = rnn_cell_forward(prepped, x, prev_state, nonlinearity="sigmoid")
    out_s, next_s = jax.block_until_ready((out_s, next_s))
    ref_out_s, ref_next_s = _reference_step(params, x, prev_state, "sigmoid")
    assert jnp.allclose(out_s, ref_out_s.reshape(1,), atol=1e-4, rtol=1e-4)
    assert jnp.allclose(next_s, ref_next_s, atol=1e-4, rtol=1e-4)

    # ---- fused sequence: all T steps inside ONE grid iteration (single chunk) ----
    T = 8
    xs = jax.random.normal(ks, (T,), jnp.float32)
    outs, states = rnn_sequence_forward(prepped, xs, prev_state, nonlinearity="tanh")
    outs, states = jax.block_until_ready((outs, states))
    ref_outs, ref_states = _reference_sequence(params, xs, prev_state, "tanh")
    assert outs.shape == (T, 1) and states.shape == (T, HIDDEN_SIZE)
    assert jnp.allclose(outs, ref_outs.reshape(T, 1), atol=1e-3, rtol=1e-3)
    assert jnp.allclose(states, ref_states, atol=1e-3, rtol=1e-3)

    # ---- small sequence whose length is NOT a multiple of 8 (block = full array) ----
    T5 = 5
    xs5 = jax.random.normal(jax.random.PRNGKey(7), (T5,), jnp.float32)
    outs5, states5 = rnn_sequence_forward(prepped, xs5, prev_state,
                                          nonlinearity="sigmoid")
    outs5, states5 = jax.block_until_ready((outs5, states5))
    ref_o5, ref_s5 = _reference_sequence(params, xs5, prev_state, "sigmoid")
    assert jnp.allclose(outs5, ref_o5.reshape(T5, 1), atol=1e-3, rtol=1e-3)
    assert jnp.allclose(states5, ref_s5, atol=1e-3, rtol=1e-3)

    # ---- chunked path: T=20 with chunk_size=8 -> 3 chunks (exercises the state
    #      carry across grid iterations and the padded tail) ----
    T20 = 20
    xs20 = jax.random.normal(jax.random.PRNGKey(3), (T20,), jnp.float32)
    outs20, states20 = rnn_sequence_forward(prepped, xs20, prev_state,
                                            nonlinearity="tanh", chunk_size=8)
    outs20, states20 = jax.block_until_ready((outs20, states20))
    ref_o20, ref_s20 = _reference_sequence(params, xs20, prev_state, "tanh")
    assert outs20.shape == (T20, 1) and states20.shape == (T20, HIDDEN_SIZE)
    assert jnp.allclose(outs20, ref_o20.reshape(T20, 1), atol=1e-3, rtol=1e-3)
    assert jnp.allclose(states20, ref_s20, atol=1e-3, rtol=1e-3)

    print("KERNEL_OK")
</pallas_src>

<mosaic_0001>
module attributes {stable_mosaic.version = 11 : i64} {
  func.func @_rnn_seq_kernel(%arg0: i32, %arg1: memref<1xf32, #tpu.memory_space<smem>>, %arg2: memref<1x10xf32, #tpu.memory_space<vmem>>, %arg3: memref<10x11xf32, #tpu.memory_space<vmem>>, %arg4: memref<2x11xf32, #tpu.memory_space<vmem>>, %arg5: memref<1x11xf32, #tpu.memory_space<vmem>>, %arg6: memref<1x10xf32, #tpu.memory_space<vmem>>) attributes {dimension_semantics = [#tpu.dimension_semantics<arbitrary>], iteration_bounds = array<i64: 1>, scalar_prefetch = 0 : i64, scratch_operands = 1 : i64, tpu.core_type = #tpu.core_type<tc>, window_params = [{transform_indices = @transform_0, window_bounds = array<i64: 1>}, {pipeline_mode = #tpu.pipeline_mode<synchronous>, transform_indices = @transform_1, window_bounds = array<i64: 1, 10>}, {pipeline_mode = #tpu.pipeline_mode<synchronous>, transform_indices = @transform_2, window_bounds = array<i64: 10, 11>}, {pipeline_mode = #tpu.pipeline_mode<synchronous>, transform_indices = @transform_3, window_bounds = array<i64: 2, 11>}, {transform_indices = @transform_4, window_bounds = array<i64: 1, 11>}]} {
    %c0_i32 = arith.constant 0 : i32
    %0 = arith.cmpi eq, %arg0, %c0_i32 : i32
    %1 = arith.extui %0 : i1 to i32
    %c0_i32_0 = arith.constant 0 : i32
    %2 = arith.cmpi ne, %1, %c0_i32_0 : i32
    scf.if %2 {
      %c0_12 = arith.constant 0 : index
      %c0_13 = arith.constant 0 : index
      %21 = vector.load %arg2[%c0_12, %c0_13] : memref<1x10xf32, #tpu.memory_space<vmem>>, vector<1x10xf32>
      %c0_14 = arith.constant 0 : index
      %c0_15 = arith.constant 0 : index
      %22 = vector.load %arg6[%c0_14, %c0_15] : memref<1x10xf32, #tpu.memory_space<vmem>>, vector<1x10xf32>
      tpu.vector_store %arg6[%c0_14, %c0_15], %21 {strides = array<i32>} : memref<1x10xf32, #tpu.memory_space<vmem>>, vector<1x10xf32>,
    } else {
    }
    %c0 = arith.constant 0 : index
    %c0_1 = arith.constant 0 : index
    %3 = vector.load %arg3[%c0, %c0_1] : memref<10x11xf32, #tpu.memory_space<vmem>>, vector<10x11xf32>
    %c0_2 = arith.constant 0 : index
    %c0_3 = arith.constant 0 : index
    %4 = vector.load %arg4[%c0_2, %c0_3] : memref<2x11xf32, #tpu.memory_space<vmem>>, vector<1x11xf32>
    %c1 = arith.constant 1 : index
    %c0_4 = arith.constant 0 : index
    %5 = vector.load %arg4[%c1, %c0_4] : memref<2x11xf32, #tpu.memory_space<vmem>>, vector<1x11xf32>
    %c1_i32 = arith.constant 1 : i32
    %6 = arith.muli %arg0, %c1_i32 : i32
    %c0_5 = arith.constant 0 : index
    %c0_6 = arith.constant 0 : index
    %7 = vector.load %arg6[%c0_5, %c0_6] : memref<1x10xf32, #tpu.memory_space<vmem>>, vector<1x10xf32>
    %c0_i32_7 = arith.constant 0 : i32
    %8 = math.tanh %7 : vector<1x10xf32>
    %cst = arith.constant dense<0.000000e+00> : vector<1x11xf32>
    %9 = tpu.matmul %8, %3, %cst {dimension_numbers = #tpu.dot_dimension_numbers<[1], [0], [0], [1], [0, 0, 1, 1], [], []>} : vector<1x10xf32>, vector<10x11xf32>, vector<1x11xf32> -> vector<1x11xf32>
    %10 = arith.addi %6, %c0_i32_7 : i32
    %11 = arith.index_cast %10 : i32 to index
    %12 = memref.load %arg1[%11] : memref<1xf32, #tpu.memory_space<smem>>
    %13 = vector.broadcast %12 : f32 to vector<1x11xf32>
    %14 = arith.mulf %13, %4 : vector<1x11xf32>
    %15 = arith.addf %9, %14 : vector<1x11xf32>
    %16 = arith.addf %15, %5 : vector<1x11xf32>
    %17 = arith.index_cast %c0_i32_7 : i32 to index
    %c0_8 = arith.constant 0 : index
    %18 = vector.load %arg5[%17, %c0_8] : memref<1x11xf32, #tpu.memory_space<vmem>>, vector<1x11xf32>
    tpu.vector_store %arg5[%17, %c0_8], %16 {strides = array<i32>} : memref<1x11xf32, #tpu.memory_space<vmem>>, vector<1x11xf32>,
    %19 = vector.extract_strided_slice %16 {offsets = [0, 0], sizes = [1, 10], strides = [1, 1]} : vector<1x11xf32> to vector<1x10xf32>
    %c1_i32_9 = arith.constant 1 : i32
    %c0_10 = arith.constant 0 : index
    %c0_11 = arith.constant 0 : index
    %20 = vector.load %arg6[%c0_10, %c0_11] : memref<1x10xf32, #tpu.memory_space<vmem>>, vector<1x10xf32>
    tpu.vector_store %arg6[%c0_10, %c0_11], %19 {strides = array<i32>} : memref<1x10xf32, #tpu.memory_space<vmem>>, vector<1x10xf32>,
    return
  }
  func.func @transform_0(%arg0: i32) -> i32 {
    %c0_i32 = arith.constant 0 : i32
    %c0_i32_0 = arith.constant 0 : i32
    return %c0_i32 : i32
  }
  func.func @transform_1(%arg0: i32) -> (i32, i32) {
    %c0_i32 = arith.constant 0 : i32
    %c0_i32_0 = arith.constant 0 : i32
    %c0_i32_1 = arith.constant 0 : i32
    return %c0_i32, %c0_i32_0 : i32, i32
  }
  func.func @transform_2(%arg0: i32) -> (i32, i32) {
    %c0_i32 = arith.constant 0 : i32
    %c0_i32_0 = arith.constant 0 : i32
    %c0_i32_1 = arith.constant 0 : i32
    return %c0_i32, %c0_i32_0 : i32, i32
  }
  func.func @transform_3(%arg0: i32) -> (i32, i32) {
    %c0_i32 = arith.constant 0 : i32
    %c0_i32_0 = arith.constant 0 : i32
    %c0_i32_1 = arith.constant 0 : i32
    return %c0_i32, %c0_i32_0 : i32, i32
  }
  func.func @transform_4(%arg0: i32) -> (i32, i32) {
    %c0_i32 = arith.constant 0 : i32
    %c0_i32_0 = arith.constant 0 : i32
    return %arg0, %c0_i32 : i32, i32
  }
}

</mosaic_0001>

<llo_original>
// kernel: rnn_sequence_forward.1
$region0: #{rnn_sequence_forward.1}
  #allocation0 [shape = 'u32[]', space=smem, size = 0x4, offset = 0x4, fixed_abs, tag = 'smem constant byte address 0x4 - core index']
  #allocation1 [shape = 'u32[144,128]{1,0:T(1,128)}', space=vmem, size = 0x12000, scoped, tag = 'internal scratch']
  #allocation2 [shape = 'f32[1,10]{1,0:T(1,128)}', space=vmem, size = 0x200, scoped, tag = 'scratch operand']
  #allocation3 [shape = 'f32[1]{0:T(128)S(6)}', space=smem, size = 0x200, scoped, tag = 'scoped memory for rnn_sequence_forward.1']
  %s0 = inlined_call_operand.<no memory space> [shape: f32[1], index: 0, kind: input, shape index: {}]
  %s1 = inlined_call_operand.vmem [shape: f32[1,10], index: 1, kind: input, shape index: {}]
  %s2 = inlined_call_operand.hbm [shape: f32[10,11], index: 2, kind: input, shape index: {}]
  %s3 = inlined_call_operand.vmem [shape: f32[2,11], index: 3, kind: input, shape index: {}]
  %s4 = inlined_call_operand.vmem [shape: f32[1,11], index: 4, kind: output, shape index: {}]
  %s5 = sld [smem:[#allocation0]]
  $region34: #{rnn_sequence_forward.1} parent=0
    _
  %s7 = ssub.s32 1, %s5
  %s8 = scalar_select 0, %s7, %s5
  %9 = sst [smem:[#allocation3]] %s0
  $region1: #{rnn_sequence_forward.1} parent=0
    #allocation4 [shape = 'u8[8192]{0}', space=vmem, size = 0x2000, scoped, tag = 'input window, operand 2, single buffered']
    #allocation5 [shape = 's32[1]{0}', space=sflag, size = 0x4, scoped, tag = 'scoped memory for rnn_sequence_forward.1']
    %10 = vsyncpa [#allocation5], 0
    // Predicated region
    $region2: #{rnn_sequence_forward.1} parent=1 // pred_check
      _
    $region3: #{rnn_sequence_forward.1} parent=1 // pred_check_branch
      %12 = sbr.rel (0) target = $region5
    $region4: #{rnn_sequence_forward.1} parent=1 // pred_region
      _
    $region5: #{rnn_sequence_forward.1} parent=1 // pred_fallthru
      _
    // Predicated region
    $region6: #{rnn_sequence_forward.1} parent=1 // pred_check
      _
    $region7: #{rnn_sequence_forward.1} parent=1 // pred_check_branch
      %14 = sbr.rel (0) target = $region9
    $region8: #{rnn_sequence_forward.1} parent=1 // pred_region
      _
    $region9: #{rnn_sequence_forward.1} parent=1 // pred_fallthru
      _
    // Predicated region
    $region10: #{rnn_sequence_forward.1} parent=1 // pred_check
      _
    $region11: #{rnn_sequence_forward.1} parent=1 // pred_check_branch
      %16 = sbr.rel (0) target = $region13
    $region12: #{rnn_sequence_forward.1} parent=1 // pred_region
      %s18 = ssub.s32 256, 256
      %19 = vsyncadd [#allocation5], %s18
      %s20 = sshll.u32 [#allocation4], 4
      %s21 = int_to_ptr.vmem [resolvable:$true] %s20
      %26 = dma.hbm_to_vmem [thread:$0]  %s2, 256, %s21, [#allocation5], 128, 128, 8
    $region13: #{rnn_sequence_forward.1} parent=1 // pred_fallthru
      _
    // Predicated region
    $region14: #{rnn_sequence_forward.1} parent=1 // pred_check
      _
    $region15: #{rnn_sequence_forward.1} parent=1 // pred_check_branch
      %28 = sbr.rel (0) target = $region17
    $region16: #{rnn_sequence_forward.1} parent=1 // pred_region
      _
    $region17: #{rnn_sequence_forward.1} parent=1 // pred_fallthru
      _
    // Predicated region
    $region18: #{rnn_sequence_forward.1} parent=1 // pred_check
      _
    $region19: #{rnn_sequence_forward.1} parent=1 // pred_check_branch
      %30 = sbr.rel (0) target = $region21
    $region20: #{rnn_sequence_forward.1} parent=1 // pred_region
      %31 = dma.done [#allocation5], 256
    $region21: #{rnn_sequence_forward.1} parent=1 // pred_fallthru
      _
    %p32 = scmp.eq.s32.totalorder 0, 0
    // Predicated region
    $region22: #{rnn_sequence_forward.1} parent=1 // pred_check
      %p33 = pneg %p32
    $region23: #{rnn_sequence_forward.1} parent=1 // pred_check_branch
      %35 = sbr.rel (%p33) target = $region25
    $region24: #{rnn_sequence_forward.1} parent=1 // pred_region
      %v36 = vld [vmem:[%s1] sm:$0x1]
      %vm37 = vcmask 73728
      %38 = vst.msk [vmem:[#allocation2] sm:$0x1] %vm37, %v36
    $region25: #{rnn_sequence_forward.1} parent=1 // pred_fallthru
      _
    %v39 = vld [vmem:[#allocation4] sm:$0xff]
    %v40 = vld [vmem:[#allocation4 + $0x8] sm:$0x3]
    %v41 = vld [vmem:[%s3] sm:$0x1]
    %v42 = vld [vmem:[%s3 + $0x1] sm:$0x1]
    %v43 = vld [vmem:[#allocation2] sm:$0x1]
    %v44 = vtanh.pop %v43
    %s45 = sld [smem:[#allocation3]]
    %v46 = vstv %s45
    %v47 = vmul.f32 %v46, %v41
    %vm48 = vcmask 80896
    %v50 = vsel %vm48, %v44, 0
    %vm52 = vcmask 1041408
    %v54 = vsel %vm52, %v40, 0
    %56 = vmatprep.subr.mxu0 0.0
    %57 = vmatpush1.msra.mxu0 0.0
    %58 = vmatprep.subr.mxu0 0.0
    %59 = vmatpush1.msra.mxu0 0.0
    %60 = vmatprep.subr.mxu0 0.0
    %61 = vmatpush1.msra.mxu0 0.0
    %62 = vmatprep.subr.mxu0 0.0
    %63 = vmatpush1.msra.mxu0 0.0
    %64 = vmatprep.subr.mxu0 0.0
    %65 = vmatpush1.msra.mxu0 0.0
    %66 = vmatprep.subr.mxu0 0.0
    %67 = vmatpush1.msra.mxu0 0.0
    %68 = vmatprep.subr.mxu0 0.0
    %69 = vmatpush1.msra.mxu0 0.0
    %70 = vmatprep.subr.mxu0 0.0
    %71 = vmatpush1.msra.mxu0 0.0
    %72 = vmatprep.subr.mxu0 0.0
    %73 = vmatpush1.msra.mxu0 0.0
    %74 = vmatprep.subr.mxu0 0.0
    %75 = vmatpush1.msra.mxu0 0.0
    %76 = vmatprep.subr.mxu0 0.0
    %77 = vmatpush1.msra.mxu0 0.0
    %78 = vmatprep.subr.mxu0 0.0
    %79 = vmatpush1.msra.mxu0 0.0
    %80 = vmatprep.subr.mxu0 0.0
    %81 = vmatpush1.msra.mxu0 0.0
    %82 = vmatprep.subr.mxu0 0.0
    %83 = vmatpush1.msra.mxu0 0.0
    %84 = vmatprep.subr.mxu0 0.0
    %85 = vmatpush1.msra.mxu0 %v54
    %86 = vmatprep.subr.mxu0 0.0
    %87 = vmatpush1.msra.mxu0 %v39
    %88 = vmatprep.subr.mxu0 0.0
    %89 = vmatpush2.msra.mxu0 0.0
    %90 = vmatprep.subr.mxu0 0.0
    %91 = vmatpush2.msra.mxu0 0.0
    %92 = vmatprep.subr.mxu0 0.0
    %93 = vmatpush2.msra.mxu0 0.0
    %94 = vmatprep.subr.mxu0 0.0
    %95 = vmatpush2.msra.mxu0 0.0
    %96 = vmatprep.subr.mxu0 0.0
    %97 = vmatpush2.msra.mxu0 0.0
    %98 = vmatprep.subr.mxu0 0.0
    %99 = vmatpush2.msra.mxu0 0.0
    %100 = vmatprep.subr.mxu0 0.0
    %101 = vmatpush2.msra.mxu0 0.0
    %102 = vmatprep.subr.mxu0 0.0
    %103 = vmatpush2.msra.mxu0 0.0
    %104 = vmatprep.subr.mxu0 0.0
    %105 = vmatpush2.msra.mxu0 0.0
    %106 = vmatprep.subr.mxu0 0.0
    %107 = vmatpush2.msra.mxu0 0.0
    %108 = vmatprep.subr.mxu0 0.0
    %109 = vmatpush2.msra.mxu0 0.0
    %110 = vmatprep.subr.mxu0 0.0
    %111 = vmatpush2.msra.mxu0 0.0
    %112 = vmatprep.subr.mxu0 0.0
    %113 = vmatpush2.msra.mxu0 0.0
    %114 = vmatprep.subr.mxu0 0.0
    %115 = vmatpush2.msra.mxu0 0.0
    %116 = vmatprep.subr.mxu0 0.0
    %117 = vmatpush2.msra.mxu0 0.0
    %118 = vmatprep.subr.mxu0 0.0
    %119 = vmatpush2.msra.mxu0 0.0
    %120 = vmatprep.mubr.f32.mxu0 0.0
    %121 = vmatmul.mubr.f32.gmra.mxu0 %v50
    %v122 = vpop.f32.mrf.mxu0
    %v123 = vadd.f32 %v47, %v122
    %v124 = vpop.f32.mrf.mxu0
    %125 = vdwg.mxu0
    %v126 = vadd.f32 %v123, %v42
    %vm127 = vcmask 81920
    %128 = vst.msk [vmem:[%s4] sm:$0x1] %vm127, %v126
    %vm129 = vcmask 73728
    %130 = vst.msk [vmem:[#allocation2] sm:$0x1] %vm129, %v126
    // Predicated region
    $region26: #{rnn_sequence_forward.1} parent=1 // pred_check
      _
    $region27: #{rnn_sequence_forward.1} parent=1 // pred_check_branch
      %132 = sbr.rel (0) target = $region29
    $region28: #{rnn_sequence_forward.1} parent=1 // pred_region
      _
    $region29: #{rnn_sequence_forward.1} parent=1 // pred_fallthru
      _
    // Predicated region
    $region30: #{rnn_sequence_forward.1} parent=1 // pred_check
      _
    $region31: #{rnn_sequence_forward.1} parent=1 // pred_check_branch
      %134 = sbr.rel (0) target = $region33
    $region32: #{rnn_sequence_forward.1} parent=1 // pred_region
      _
    $region33: #{rnn_sequence_forward.1} parent=1 // pred_fallthru
      _
    %135 = vsyncpa [#allocation5], 1

</llo_original>
